<compile_context>
chip_gen: v6e
topology: v6e:2x2x1
jax: 0.10.0
libtpu: 0.0.40
codegen_flags: <defaults>
</compile_context>

<pallas_src>
import numpy as np
import jax
import jax.numpy as jnp
from jax.experimental import pallas as pl
from jax.experimental.pallas import tpu as pltpu


# ---------------------------------------------------------------------------
# Pallas kernel
# ---------------------------------------------------------------------------

def _nearest_upsample_kernel(x_ref, rep_ref, o_ref):
    """out_block = x_block @ rep  (one MXU matmul; rep is a constant 0/1 matrix).

    x_ref:   (Bm, hg*W)          rows = flattened (N, C, H/hg)
    rep_ref: (hg*W, hg*f*W*f)    VMEM-resident replication matrix (DMA'd once)
    o_ref:   (Bm, hg*f*W*f)      columns = flattened (hg, f, W*f)
    """
    o_ref[...] = jnp.dot(
        x_ref[...], rep_ref[...], preferred_element_type=jnp.float32
    ).astype(o_ref.dtype)


# ---------------------------------------------------------------------------
# Wrapper helpers
# ---------------------------------------------------------------------------

def _parallel_cores():
    """Best-effort TensorCore count a 'parallel' grid axis can shard across."""
    try:
        kind = jax.devices()[0].device_kind.lower()
    except Exception:
        return 1
    # v7x has two TensorCores per chip, v4/v5p are megacore; v5e / v6e have one.
    return 2 if any(tag in kind for tag in ("v7", "v4", "v5p")) else 1


def _pick_row_group(H, W, f, elt):
    """Fold hg consecutive input rows into the lane dim so the output block's
    last dimension reaches >=128 lanes (unmasked stores), keeping rep tiny."""
    best = 1
    for hg in range(1, H + 1):
        if H % hg:
            continue
        rep_bytes = (hg * W) * (hg * W * f * f) * elt
        if hg > 1 and rep_bytes > (1 << 20):   # keep the constant weight small
            break
        best = hg
        if hg * W * f * f >= 128:
            break
    return best


# ---------------------------------------------------------------------------
# Public wrapper  (== Interpolate.forward)
# ---------------------------------------------------------------------------

def interpolate_nearest(x_nchw, factor):
    """nn.functional.interpolate(x, scale_factor=factor, mode='nearest'), NCHW."""
    f = int(factor)
    assert f >= 1 and float(factor) == float(f), \
        "only integer scale factors implemented"   # TODO(synk): non-integer factors
    assert jnp.issubdtype(x_nchw.dtype, jnp.floating), \
        "floating inputs only"                     # TODO(synk): integer dtypes

    N, C, H, W = map(int, x_nchw.shape)
    Wo = W * f
    elt = jnp.dtype(x_nchw.dtype).itemsize

    # Fold hg consecutive H rows into the lane dimension (lane-dense output).
    hg = _pick_row_group(H, W, f, elt)
    R = N * C * (H // hg)              # matmul M dimension (tall)
    Kin = hg * W                       # input lane width / matmul K
    Kout = hg * f * Wo                 # output lane width (= f^2 * Kin)

    # Lane-dense 2-D view (pure metadata reshape, row-major contiguous).
    x2d = x_nchw.reshape(R, Kin)

    # Constant replication matrix, built once on host, same dtype as x
    # (0/1 is exact in bf16/f32):
    #   out2d[r, hh*f*Wo + i*Wo + jo] = x2d[r, hh*W + jo//f]
    m = np.arange(Kout)
    src = (m // (f * Wo)) * W + (m % Wo) // f
    rep_np = (src[None, :] == np.arange(Kin)[:, None])
    rep = jnp.asarray(rep_np, dtype=x_nchw.dtype)

    # ---- row-block sizing against an explicit VMEM budget -------------------
    in_row_b, out_row_b = Kin * elt, Kout * elt   # output block dominates (f^2 x)
    OUT_BLOCK_BUDGET = 2 << 20                    # ~2 MiB out block: roofline-sized
    if R % 8 != 0:
        bm = R                                    # full-extent block is always legal
    else:
        bm = min(R, max(8, ((OUT_BLOCK_BUDGET // out_row_b) // 8) * 8))
        n_par = _parallel_cores()
        # dual-TC chips: make sure both TensorCores get at least one block
        while n_par > 1 and pl.cdiv(R, bm) < n_par and bm > 8:
            bm = max(8, ((bm // 2) // 8) * 8)
    grid = (pl.cdiv(R, bm),)

    in_blk_b, out_blk_b = bm * in_row_b, bm * out_row_b
    rep_b = Kin * Kout * elt
    # double-buffered in/out blocks + resident rep + headroom, capped for v7x (64 MiB).
    vmem_limit = int(min(48 << 20,
                         max(16 << 20, 2 * (in_blk_b + out_blk_b) + rep_b + (2 << 20))))

    cost = pl.CostEstimate(
        flops=2 * R * Kin * Kout,                 # tiny; the op is HBM-bound
        transcendentals=0,
        bytes_accessed=(R * Kin + R * Kout) * elt + rep_b)

    out2d = pl.pallas_call(
        _nearest_upsample_kernel,
        out_shape=jax.ShapeDtypeStruct((R, Kout), x_nchw.dtype),
        grid=grid,
        in_specs=[
            pl.BlockSpec((bm, Kin), lambda i: (i, 0)),
            pl.BlockSpec((Kin, Kout), lambda i: (0, 0)),   # constant block: DMA'd once
        ],
        out_specs=pl.BlockSpec((bm, Kout), lambda i: (i, 0)),
        compiler_params=pltpu.CompilerParams(
            dimension_semantics=("parallel",),
            vmem_limit_bytes=vmem_limit),
        cost_estimate=cost,
    )(x2d, rep)

    # (R, Kout) == (N, C, H/hg, hg, f, Wo) -> merge (H/hg, hg, f) -> (N, C, H*f, W*f)
    return out2d.reshape(N, C, H * f, Wo)


# ---------------------------------------------------------------------------

if __name__ == "__main__":
    key = jax.random.PRNGKey(0)
    N, C, H, W = 2, 4, 16, 16          # PyTorch NCHW input
    factor = 2

    x = jax.random.normal(key, (N, C, H, W), dtype=jnp.float32)

    y = jax.block_until_ready(interpolate_nearest(x, factor))

    # Pure-JAX reference: nearest upsample with integer factor == repeat.
    ref = jnp.repeat(jnp.repeat(x, factor, axis=2), factor, axis=3)

    assert y.shape == (N, C, H * factor, W * factor)
    np.testing.assert_allclose(np.asarray(y), np.asarray(ref), rtol=0, atol=1e-5)

    print("KERNEL_OK")
</pallas_src>

<mosaic_0001>
module attributes {stable_mosaic.version = 11 : i64} {
  func.func @_nearest_upsample_kernel(%arg0: i32, %arg1: memref<64x32xf32, #tpu.memory_space<vmem>>, %arg2: memref<32x128xf32, #tpu.memory_space<vmem>>, %arg3: memref<64x128xf32, #tpu.memory_space<vmem>>) attributes {dimension_semantics = [#tpu.dimension_semantics<parallel>], iteration_bounds = array<i64: 1>, scalar_prefetch = 0 : i64, scratch_operands = 0 : i64, tpu.core_type = #tpu.core_type<tc>, window_params = [{transform_indices = @transform_0, window_bounds = array<i64: 64, 32>}, {pipeline_mode = #tpu.pipeline_mode<synchronous>, transform_indices = @transform_1, window_bounds = array<i64: 32, 128>}, {transform_indices = @transform_2, window_bounds = array<i64: 64, 128>}]} {
    %c0 = arith.constant 0 : index
    %c0_0 = arith.constant 0 : index
    %0 = vector.load %arg1[%c0, %c0_0] : memref<64x32xf32, #tpu.memory_space<vmem>>, vector<64x32xf32>
    %c0_1 = arith.constant 0 : index
    %c0_2 = arith.constant 0 : index
    %1 = vector.load %arg2[%c0_1, %c0_2] : memref<32x128xf32, #tpu.memory_space<vmem>>, vector<32x128xf32>
    %cst = arith.constant dense<0.000000e+00> : vector<64x128xf32>
    %2 = tpu.matmul %0, %1, %cst {dimension_numbers = #tpu.dot_dimension_numbers<[1], [0], [0], [1], [0, 0, 1, 1], [], []>} : vector<64x32xf32>, vector<32x128xf32>, vector<64x128xf32> -> vector<64x128xf32>
    %c0_3 = arith.constant 0 : index
    %c0_4 = arith.constant 0 : index
    %3 = vector.load %arg3[%c0_3, %c0_4] : memref<64x128xf32, #tpu.memory_space<vmem>>, vector<64x128xf32>
    tpu.vector_store %arg3[%c0_3, %c0_4], %2 {strides = array<i32>} : memref<64x128xf32, #tpu.memory_space<vmem>>, vector<64x128xf32>,
    return
  }
  func.func @transform_0(%arg0: i32) -> (i32, i32) {
    %c0_i32 = arith.constant 0 : i32
    %c0_i32_0 = arith.constant 0 : i32
    return %arg0, %c0_i32 : i32, i32
  }
  func.func @transform_1(%arg0: i32) -> (i32, i32) {
    %c0_i32 = arith.constant 0 : i32
    %c0_i32_0 = arith.constant 0 : i32
    %c0_i32_1 = arith.constant 0 : i32
    return %c0_i32, %c0_i32_0 : i32, i32
  }
  func.func @transform_2(%arg0: i32) -> (i32, i32) {
    %c0_i32 = arith.constant 0 : i32
    %c0_i32_0 = arith.constant 0 : i32
    return %arg0, %c0_i32 : i32, i32
  }
}

</mosaic_0001>

<llo_original>
// kernel: tpu_custom_call.1
$region0: #{tpu_custom_call.1}
  #allocation0 [shape = 'u32[]', space=smem, size = 0x4, offset = 0x4, fixed_abs, tag = 'smem constant byte address 0x4 - core index']
  #allocation1 [shape = 'u32[144,128]{1,0:T(1,128)}', space=vmem, size = 0x12000, scoped, tag = 'internal scratch']
  %s0 = inlined_call_operand.vmem [shape: f32[64,32], index: 0, kind: input, shape index: {}]
  %s1 = inlined_call_operand.vmem [shape: f32[32,128], index: 1, kind: input, shape index: {}]
  %s2 = inlined_call_operand.hbm [shape: f32[64,128], index: 2, kind: output, shape index: {}]
  %s3 = sld [smem:[#allocation0]]
  $region18: #{tpu_custom_call.1} parent=0
    _
  %s5 = ssub.s32 1, %s3
  %s6 = scalar_select 0, %s5, %s3
  $region1: #{tpu_custom_call.1} parent=0
    #allocation2 [shape = 'u8[32768]{0}', space=vmem, size = 0x8000, scoped, tag = 'output window, operand 0, single buffered']
    #allocation3 [shape = 's32[1]{0}', space=sflag, size = 0x4, scoped, tag = 'scoped memory for tpu_custom_call.1']
    %7 = vsyncpa [#allocation3], 0
    // Predicated region
    $region2: #{tpu_custom_call.1} parent=1 // pred_check
      _
    $region3: #{tpu_custom_call.1} parent=1 // pred_check_branch
      %9 = sbr.rel (0) target = $region5
    $region4: #{tpu_custom_call.1} parent=1 // pred_region
      _
    $region5: #{tpu_custom_call.1} parent=1 // pred_fallthru
      _
    // Predicated region
    $region6: #{tpu_custom_call.1} parent=1 // pred_check
      _
    $region7: #{tpu_custom_call.1} parent=1 // pred_check_branch
      %11 = sbr.rel (0) target = $region9
    $region8: #{tpu_custom_call.1} parent=1 // pred_region
      _
    $region9: #{tpu_custom_call.1} parent=1 // pred_fallthru
      _
    %v12 = vld [vmem:[%s0] sm:$0xff]
    %v13 = vld [vmem:[%s0 + $0x8] sm:$0xff]
    %v14 = vld [vmem:[%s0 + $0x10] sm:$0xff]
    %v15 = vld [vmem:[%s0 + $0x18] sm:$0xff]
    %v16 = vld [vmem:[%s0 + $0x20] sm:$0xff]
    %v17 = vld [vmem:[%s0 + $0x28] sm:$0xff]
    %v18 = vld [vmem:[%s0 + $0x30] sm:$0xff]
    %v19 = vld [vmem:[%s0 + $0x38] sm:$0xff]
    %v20 = vld [vmem:[%s1] sm:$0xff]
    %v21 = vld [vmem:[%s1 + $0x8] sm:$0xff]
    %v22 = vld [vmem:[%s1 + $0x10] sm:$0xff]
    %v23 = vld [vmem:[%s1 + $0x18] sm:$0xff]
    %vm24 = vcmask 261120
    %v26 = vsel %vm24, %v12, 0
    %v29 = vsel %vm24, %v13, 0
    %v32 = vsel %vm24, %v14, 0
    %v35 = vsel %vm24, %v15, 0
    %v38 = vsel %vm24, %v16, 0
    %v41 = vsel %vm24, %v17, 0
    %v44 = vsel %vm24, %v18, 0
    %v47 = vsel %vm24, %v19, 0
    %49 = vmatprep.subr.mxu0 0.0
    %50 = vmatpush1.msra.mxu0 0.0
    %51 = vmatprep.subr.mxu0 0.0
    %52 = vmatpush1.msra.mxu0 0.0
    %53 = vmatprep.subr.mxu0 0.0
    %54 = vmatpush1.msra.mxu0 0.0
    %55 = vmatprep.subr.mxu0 0.0
    %56 = vmatpush1.msra.mxu0 0.0
    %57 = vmatprep.subr.mxu0 0.0
    %58 = vmatpush1.msra.mxu0 0.0
    %59 = vmatprep.subr.mxu0 0.0
    %60 = vmatpush1.msra.mxu0 0.0
    %61 = vmatprep.subr.mxu0 0.0
    %62 = vmatpush1.msra.mxu0 0.0
    %63 = vmatprep.subr.mxu0 0.0
    %64 = vmatpush1.msra.mxu0 0.0
    %65 = vmatprep.subr.mxu0 0.0
    %66 = vmatpush1.msra.mxu0 0.0
    %67 = vmatprep.subr.mxu0 0.0
    %68 = vmatpush1.msra.mxu0 0.0
    %69 = vmatprep.subr.mxu0 0.0
    %70 = vmatpush1.msra.mxu0 0.0
    %71 = vmatprep.subr.mxu0 0.0
    %72 = vmatpush1.msra.mxu0 0.0
    %73 = vmatprep.subr.mxu0 0.0
    %74 = vmatpush1.msra.mxu0 %v23
    %75 = vmatprep.subr.mxu0 0.0
    %76 = vmatpush1.msra.mxu0 %v22
    %77 = vmatprep.subr.mxu0 0.0
    %78 = vmatpush1.msra.mxu0 %v21
    %79 = vmatprep.subr.mxu0 0.0
    %80 = vmatpush1.msra.mxu0 %v20
    %81 = vmatprep.subr.mxu0 0.0
    %82 = vmatpush2.msra.mxu0 0.0
    %83 = vmatprep.subr.mxu0 0.0
    %84 = vmatpush2.msra.mxu0 0.0
    %85 = vmatprep.subr.mxu0 0.0
    %86 = vmatpush2.msra.mxu0 0.0
    %87 = vmatprep.subr.mxu0 0.0
    %88 = vmatpush2.msra.mxu0 0.0
    %89 = vmatprep.subr.mxu0 0.0
    %90 = vmatpush2.msra.mxu0 0.0
    %91 = vmatprep.subr.mxu0 0.0
    %92 = vmatpush2.msra.mxu0 0.0
    %93 = vmatprep.subr.mxu0 0.0
    %94 = vmatpush2.msra.mxu0 0.0
    %95 = vmatprep.subr.mxu0 0.0
    %96 = vmatpush2.msra.mxu0 0.0
    %97 = vmatprep.subr.mxu0 0.0
    %98 = vmatpush2.msra.mxu0 0.0
    %99 = vmatprep.subr.mxu0 0.0
    %100 = vmatpush2.msra.mxu0 0.0
    %101 = vmatprep.subr.mxu0 0.0
    %102 = vmatpush2.msra.mxu0 0.0
    %103 = vmatprep.subr.mxu0 0.0
    %104 = vmatpush2.msra.mxu0 0.0
    %105 = vmatprep.subr.mxu0 0.0
    %106 = vmatpush2.msra.mxu0 0.0
    %107 = vmatprep.subr.mxu0 0.0
    %108 = vmatpush2.msra.mxu0 0.0
    %109 = vmatprep.subr.mxu0 0.0
    %110 = vmatpush2.msra.mxu0 0.0
    %111 = vmatprep.subr.mxu0 0.0
    %112 = vmatpush2.msra.mxu0 0.0
    %113 = vmatprep.mubr.f32.mxu0 0.0
    %114 = vmatmul.mubr.f32.gmra.mxu0 %v26
    %v115 = vpop.f32.mrf.mxu0
    %v116 = vadd.f32 0.0, %v115
    %v117 = vpop.f32.mrf.mxu0
    %118 = vmatprep.mubr.f32.mxu0 0.0
    %119 = vmatmul.mubr.f32.gmra.mxu0 %v29
    %v120 = vpop.f32.mrf.mxu0
    %v121 = vadd.f32 0.0, %v120
    %v122 = vpop.f32.mrf.mxu0
    %123 = vmatprep.mubr.f32.mxu0 0.0
    %124 = vmatmul.mubr.f32.gmra.mxu0 %v32
    %v125 = vpop.f32.mrf.mxu0
    %v126 = vadd.f32 0.0, %v125
    %v127 = vpop.f32.mrf.mxu0
    %128 = vmatprep.mubr.f32.mxu0 0.0
    %129 = vmatmul.mubr.f32.gmra.mxu0 %v35
    %v130 = vpop.f32.mrf.mxu0
    %v131 = vadd.f32 0.0, %v130
    %v132 = vpop.f32.mrf.mxu0
    %133 = vmatprep.mubr.f32.mxu0 0.0
    %134 = vmatmul.mubr.f32.gmra.mxu0 %v38
    %v135 = vpop.f32.mrf.mxu0
    %v136 = vadd.f32 0.0, %v135
    %v137 = vpop.f32.mrf.mxu0
    %138 = vmatprep.mubr.f32.mxu0 0.0
    %139 = vmatmul.mubr.f32.gmra.mxu0 %v41
    %v140 = vpop.f32.mrf.mxu0
    %v141 = vadd.f32 0.0, %v140
    %v142 = vpop.f32.mrf.mxu0
    %143 = vmatprep.mubr.f32.mxu0 0.0
    %144 = vmatmul.mubr.f32.gmra.mxu0 %v44
    %v145 = vpop.f32.mrf.mxu0
    %v146 = vadd.f32 0.0, %v145
    %v147 = vpop.f32.mrf.mxu0
    %148 = vmatprep.mubr.f32.mxu0 0.0
    %149 = vmatmul.mubr.f32.gmra.mxu0 %v47
    %v150 = vpop.f32.mrf.mxu0
    %v151 = vadd.f32 0.0, %v150
    %v152 = vpop.f32.mrf.mxu0
    %153 = vdwg.mxu0
    %154 = vst [vmem:[#allocation2] sm:$0xff] %v116
    %155 = vst [vmem:[#allocation2 + $0x8] sm:$0xff] %v121
    %156 = vst [vmem:[#allocation2 + $0x10] sm:$0xff] %v126
    %157 = vst [vmem:[#allocation2 + $0x18] sm:$0xff] %v131
    %158 = vst [vmem:[#allocation2 + $0x20] sm:$0xff] %v136
    %159 = vst [vmem:[#allocation2 + $0x28] sm:$0xff] %v141
    %160 = vst [vmem:[#allocation2 + $0x30] sm:$0xff] %v146
    %161 = vst [vmem:[#allocation2 + $0x38] sm:$0xff] %v151
    // Predicated region
    $region10: #{tpu_custom_call.1} parent=1 // pred_check
      _
    $region11: #{tpu_custom_call.1} parent=1 // pred_check_branch
      %163 = sbr.rel (0) target = $region13
    $region12: #{tpu_custom_call.1} parent=1 // pred_region
      %s165 = ssub.s32 1024, 1024
      %166 = vsyncadd [#allocation3], %s165
      %s167 = sshll.u32 [#allocation2], 4
      %s168 = int_to_ptr.vmem [resolvable:$true] %s167
      %173 = dma.vmem_to_hbm [thread:$0]  %s168, 1024, %s2, [#allocation3], 128, 128, 8
    $region13: #{tpu_custom_call.1} parent=1 // pred_fallthru
      _
    // Predicated region
    $region14: #{tpu_custom_call.1} parent=1 // pred_check
      _
    $region15: #{tpu_custom_call.1} parent=1 // pred_check_branch
      %175 = sbr.rel (0) target = $region17
    $region16: #{tpu_custom_call.1} parent=1 // pred_region
      %176 = dma.done [#allocation3], 1024
    $region17: #{tpu_custom_call.1} parent=1 // pred_fallthru
      _
    %177 = vsyncpa [#allocation3], 1

</llo_original>
